<compile_context>
chip_gen: v7x
topology: tpu7x:2x2x1
jax: 0.10.0
libtpu: 0.0.40
codegen_flags: <defaults>
</compile_context>

<pallas_src>
from functools import partial

import jax
import jax.numpy as jnp
from jax.experimental import pallas as pl
from jax.experimental.pallas import tpu as pltpu


# ----------------------------------------------------------------------------
# Pallas kernels
# ----------------------------------------------------------------------------
def _vmem_spec():
    return pl.BlockSpec(memory_space=pltpu.MemorySpace.VMEM)


def _dual_linear_kernel(img_ref, txt_ref, w1t_ref, w2t_ref, o1_ref, o2_ref):
    # Fused linear_1 / linear_2 (both bias-free): one kernel launch.
    f32 = jnp.float32
    o1_ref[...] = jnp.dot(
        img_ref[...].astype(w1t_ref.dtype), w1t_ref[...],
        preferred_element_type=f32).astype(o1_ref.dtype)
    o2_ref[...] = jnp.dot(
        txt_ref[...].astype(w2t_ref.dtype), w2t_ref[...],
        preferred_element_type=f32).astype(o2_ref.dtype)


def _gi_precompute_kernel(t_ref, w3t_ref, w_iht_ref, gi_ref):
    """Batched input-gate precompute for all T steps at once.

    t_ref     (T*B, 2H)  flattened t_embed sequence
    w3t_ref   (2H, H)    linear_3.weight^T          (bf16)
    w_iht_ref (H, 3H)    GRUCell.weight_ih^T (r|z|n) (bf16)
    gi_ref    (T*B, 3H)  f32 output
    """
    f32 = jnp.float32
    x3 = jnp.dot(t_ref[...].astype(w3t_ref.dtype), w3t_ref[...],
                 preferred_element_type=f32)                        # (M, H)
    gi_ref[...] = jnp.dot(x3.astype(w_iht_ref.dtype), w_iht_ref[...],
                          preferred_element_type=f32).astype(gi_ref.dtype)


def _gru_recur_kernel(gi_ref, hx0_ref, whh_ref, h_seq_ref, hx_out_ref, h_carry):
    """Sequential GRU recurrence, T_BLK time steps per grid iteration.

    gi_ref     (T_BLK, B, 3H)  precomputed input gates for this time block
    hx0_ref    (B, H)          initial hidden state (read only at grid step 0)
    whh_ref    (H, 3H)         w_hh^T, resident (constant index_map)
    h_seq_ref  (T_BLK, B, H)   per-step hidden states (output)
    hx_out_ref (B, H)          final hidden state (resident, written at end)
    h_carry    VMEM (B, H) f32 scratch carrying h across grid iterations
    """
    f32 = jnp.float32
    H = hx0_ref.shape[-1]
    t_blk = gi_ref.shape[0]

    @pl.when(pl.program_id(0) == 0)
    def _():
        h_carry[...] = hx0_ref[...].astype(f32)

    whh = whh_ref[...]

    def body(i, h):
        gi = gi_ref[i].astype(f32)                                   # (B, 3H)
        gh = jnp.dot(h, whh, preferred_element_type=f32)             # (B, 3H)
        r = jax.nn.sigmoid(gi[:, 0 * H:1 * H] + gh[:, 0 * H:1 * H])
        z = jax.nn.sigmoid(gi[:, 1 * H:2 * H] + gh[:, 1 * H:2 * H])
        n = jnp.tanh(gi[:, 2 * H:3 * H] + r * gh[:, 2 * H:3 * H])
        h_new = (1.0 - z) * n + z * h
        h_seq_ref[i] = h_new.astype(h_seq_ref.dtype)
        return h_new

    h_final = jax.lax.fori_loop(0, t_blk, body, h_carry[...], unroll=True)
    h_carry[...] = h_final
    # Constant output block index -> stays resident, written back once at end.
    hx_out_ref[...] = h_final.astype(hx_out_ref.dtype)


def _x_post_kernel(h_ref, w4t_ref, x_ref):
    """Batched x = h_seq @ w4^T over all T steps at once."""
    f32 = jnp.float32
    x_ref[...] = jnp.dot(h_ref[...].astype(w4t_ref.dtype), w4t_ref[...],
                         preferred_element_type=f32).astype(x_ref.dtype)


def _gru_step_kernel(t_ref, hx_ref, wcomb_ref, whh_ref, w4t_ref,
                     x_out_ref, hx_out_ref):
    """Single fully-fused Stage1.gru() step (latency-bound path, f32)."""
    f32 = jnp.float32
    H = hx_ref.shape[-1]

    t = t_ref[...].astype(f32)
    hx = hx_ref[...].astype(f32)

    gi = jnp.dot(t, wcomb_ref[...], preferred_element_type=f32)   # (B, 3H)
    gh = jnp.dot(hx, whh_ref[...], preferred_element_type=f32)    # (B, 3H)

    r = jax.nn.sigmoid(gi[:, 0 * H:1 * H] + gh[:, 0 * H:1 * H])
    z = jax.nn.sigmoid(gi[:, 1 * H:2 * H] + gh[:, 1 * H:2 * H])
    n = jnp.tanh(gi[:, 2 * H:3 * H] + r * gh[:, 2 * H:3 * H])
    h_new = (1.0 - z) * n + z * hx

    hx_out_ref[...] = h_new.astype(hx_out_ref.dtype)
    x_out_ref[...] = jnp.dot(
        h_new, w4t_ref[...], preferred_element_type=f32).astype(x_out_ref.dtype)


# ----------------------------------------------------------------------------
# Wrappers
# ----------------------------------------------------------------------------
_VMEM_LIMIT = 48 * 1024 * 1024   # headroom for H=512 on v5e; < v7x 64MiB phys.


@jax.jit
def pallas_forward(img, txt, w1t_bf, w2t_bf):
    B, H = img.shape
    return pl.pallas_call(
        _dual_linear_kernel,
        out_shape=(jax.ShapeDtypeStruct((B, H), img.dtype),
                   jax.ShapeDtypeStruct((B, H), txt.dtype)),
        in_specs=[_vmem_spec()] * 4,
        out_specs=(_vmem_spec(), _vmem_spec()),
    )(img, txt, w1t_bf, w2t_bf)


@partial(jax.jit, donate_argnums=(1,))
def pallas_gru_step(t_embed, hx, w_comb, w_hh_t, w4t):
    """One recurrent step.  Returns (x, new_hx), both (B, H)."""
    B = t_embed.shape[0]
    H = hx.shape[1]
    out_shapes = (
        jax.ShapeDtypeStruct((B, H), t_embed.dtype),  # x
        jax.ShapeDtypeStruct((B, H), hx.dtype),       # new hx
    )
    return pl.pallas_call(
        _gru_step_kernel,
        out_shape=out_shapes,
        in_specs=[_vmem_spec()] * 5,
        out_specs=(_vmem_spec(), _vmem_spec()),
        # hx buffer is donated by the jit wrapper, so this alias is real (P8).
        input_output_aliases={1: 1},
    )(t_embed, hx, w_comb, w_hh_t, w4t)


@partial(jax.jit, static_argnames=("t_blk",))
def pallas_gru_sequence(t_seq, hx, w3t_bf, w_iht_bf, w_hh_t, w4t_bf, *, t_blk):
    """Run a whole (T, B, 2H) sequence.

    Three phases:
      1) batched gi precompute (bf16 MXU, f32 acc) for all T steps,
      2) sequential recurrence (grid over time blocks, h in VMEM scratch),
      3) batched x = h_seq @ w4^T.
    Returns (x_seq (T,B,H), final_hx (B,H)).
    """
    T, B, twoH = t_seq.shape
    H = hx.shape[1]
    M = T * B

    # --- phase 1: gi for all steps as one big matmul pair -------------------
    gi = pl.pallas_call(
        _gi_precompute_kernel,
        out_shape=jax.ShapeDtypeStruct((M, 3 * H), jnp.float32),
        in_specs=[_vmem_spec()] * 3,
        out_specs=_vmem_spec(),
    )(t_seq.reshape(M, twoH), w3t_bf, w_iht_bf).reshape(T, B, 3 * H)

    # --- phase 2: sequential recurrence, T_BLK steps per grid iteration ----
    grid = (T // t_blk,)
    h_seq, new_hx = pl.pallas_call(
        _gru_recur_kernel,
        grid=grid,
        in_specs=[
            pl.BlockSpec((t_blk, B, 3 * H), lambda tb: (tb, 0, 0)),  # gi block
            pl.BlockSpec((B, H), lambda tb: (0, 0)),                 # hx0
            pl.BlockSpec((H, 3 * H), lambda tb: (0, 0)),             # w_hh^T
        ],
        out_specs=(
            pl.BlockSpec((t_blk, B, H), lambda tb: (tb, 0, 0)),      # h_seq
            pl.BlockSpec((B, H), lambda tb: (0, 0)),                 # final hx
        ),
        out_shape=(
            jax.ShapeDtypeStruct((T, B, H), jnp.float32),
            jax.ShapeDtypeStruct((B, H), hx.dtype),
        ),
        scratch_shapes=[pltpu.VMEM((B, H), jnp.float32)],
        compiler_params=pltpu.CompilerParams(
            dimension_semantics=("arbitrary",),     # true time recurrence
            vmem_limit_bytes=_VMEM_LIMIT),
    )(gi, hx, w_hh_t)

    # --- phase 3: x = h_seq @ w4^T as one big matmul -------------------------
    x_seq = pl.pallas_call(
        _x_post_kernel,
        out_shape=jax.ShapeDtypeStruct((M, H), t_seq.dtype),
        in_specs=[_vmem_spec()] * 2,
        out_specs=_vmem_spec(),
    )(h_seq.reshape(M, H), w4t_bf).reshape(T, B, H)

    return x_seq, new_hx


# ----------------------------------------------------------------------------
# Module
# ----------------------------------------------------------------------------
class Stage1:
    """JAX/Pallas port of the PyTorch Stage1 module (all linears bias=False)."""

    def __init__(self, hid_dim, key):
        self.hid_dim = hid_dim
        ks = jax.random.split(key, 6)
        scale = 1.0 / jnp.sqrt(hid_dim)

        def init(k, shape):
            return jax.random.uniform(k, shape, jnp.float32, -scale, scale)

        # Raw PyTorch-layout parameters (kept for the numerical reference).
        self.w1 = init(ks[0], (hid_dim, hid_dim))          # linear_1.weight
        self.w2 = init(ks[1], (hid_dim, hid_dim))          # linear_2.weight
        self.w3 = init(ks[2], (hid_dim, 2 * hid_dim))      # linear_3.weight
        self.w_ih = init(ks[3], (3 * hid_dim, hid_dim))    # GRUCell.weight_ih (r|z|n)
        self.w_hh = init(ks[4], (3 * hid_dim, hid_dim))    # GRUCell.weight_hh (r|z|n)
        self.w4 = init(ks[5], (hid_dim, hid_dim))          # linear_4.weight

        # --- One-time precompute (hoisted out of all hot paths) -------------
        bf16 = jnp.bfloat16
        # forward(): bf16 weights, f32 accumulation.
        self.w1t_bf = self.w1.T.astype(bf16)
        self.w2t_bf = self.w2.T.astype(bf16)
        # Single-step (latency-bound) path: fold linear_3 into the GRU input
        # gates, all f32 for tight numerics.
        self.w_comb = self.w3.T @ self.w_ih.T              # (2H, 3H)
        self.w_hh_t = self.w_hh.T                          # (H, 3H), f32
        self.w4t = self.w4.T                               # (H, H),  f32
        # Sequence (throughput) path: unfolded two-matmul gi precompute with
        # bf16 MXU operands; recurrence matmul (w_hh_t) stays f32.
        self.w3t_bf = self.w3.T.astype(bf16)               # (2H, H)
        self.w_iht_bf = self.w_ih.T.astype(bf16)           # (H, 3H)
        self.w4t_bf = self.w4t.astype(bf16)                # (H, H)

        self.hx = None

    def forward(self, img, txt):
        # Mirrors torch: applies linear_1 / linear_2 and discards, returns None.
        _img, _txt = pallas_forward(img, txt, self.w1t_bf, self.w2t_bf)
        del _img, _txt
        return None

    def gru(self, t_embed):
        x, new_hx = pallas_gru_step(
            t_embed, self.hx, self.w_comb, self.w_hh_t, self.w4t)
        self.hx = new_hx
        return x

    def gru_sequence(self, t_seq):
        """Optimized path: run a whole (T, B, 2H) sequence on-device."""
        T = t_seq.shape[0]
        t_blk = self._pick_t_blk(T)
        x_seq, new_hx = pallas_gru_sequence(
            t_seq, self.hx, self.w3t_bf, self.w_iht_bf, self.w_hh_t,
            self.w4t_bf, t_blk=t_blk)
        self.hx = new_hx
        return x_seq

    @staticmethod
    def _pick_t_blk(T, cap=32):
        t = min(T, cap)
        while T % t != 0:
            t -= 1
        return t

    def init_hid(self, batch_size=1):
        self.hx = jnp.zeros((batch_size, self.hid_dim), jnp.float32)

    def detach_hid(self):
        self.hx = jax.lax.stop_gradient(self.hx)


# ----------------------------------------------------------------------------
# Pure-JAX reference (PyTorch GRUCell semantics, bias=False, gate order r,z,n)
# ----------------------------------------------------------------------------
def _ref_gru_step(t_embed, hx, w3, w_ih, w_hh, w4):
    hid = hx.shape[1]
    x3 = t_embed @ w3.T
    gi = x3 @ w_ih.T
    gh = hx @ w_hh.T
    r = jax.nn.sigmoid(gi[:, :hid] + gh[:, :hid])
    z = jax.nn.sigmoid(gi[:, hid:2 * hid] + gh[:, hid:2 * hid])
    n = jnp.tanh(gi[:, 2 * hid:] + r * gh[:, 2 * hid:])
    h_new = (1.0 - z) * n + z * hx
    return h_new @ w4.T, h_new


if __name__ == "__main__":
    key = jax.random.PRNGKey(0)
    hid_dim = 128    # lane-dense (multiple of 128); spec uses 512
    batch = 8        # fills all 8 f32 sublanes
    seq_len = 16     # 2 time blocks of T_BLK=16? -> picks 16; exercises grid>1 below

    model = Stage1(hid_dim=hid_dim, key=jax.random.fold_in(key, 1))
    model.init_hid(batch_size=batch)

    # Deterministic example inputs.
    t_embed = jax.random.normal(jax.random.fold_in(key, 2),
                                (batch, 2 * hid_dim), jnp.float32)
    img = jax.random.normal(jax.random.fold_in(key, 3), (batch, hid_dim), jnp.float32)
    txt = jax.random.normal(jax.random.fold_in(key, 4), (batch, hid_dim), jnp.float32)
    t_seq = jax.random.normal(jax.random.fold_in(key, 5),
                              (seq_len, batch, 2 * hid_dim), jnp.float32)

    # forward() — mirrors torch (computes linear_1/linear_2, returns None).
    assert model.forward(img, txt) is None

    # ---- single-step gru() path (f32, tight tolerance) ----
    x = jax.block_until_ready(model.gru(t_embed))
    hx1 = jax.block_until_ready(model.hx)

    x_ref, hx_ref = _ref_gru_step(
        t_embed, jnp.zeros((batch, hid_dim), jnp.float32),
        model.w3, model.w_ih, model.w_hh, model.w4)
    assert jnp.allclose(x, x_ref, atol=2e-4, rtol=2e-4), "step-0 x mismatch"
    assert jnp.allclose(hx1, hx_ref, atol=2e-4, rtol=2e-4), "step-0 hx mismatch"

    # second recurrent step (hx1 buffer is donated on this call; already checked)
    x2 = jax.block_until_ready(model.gru(t_embed))
    x2_ref, hx2_ref = _ref_gru_step(t_embed, hx_ref,
                                    model.w3, model.w_ih, model.w_hh, model.w4)
    assert jnp.allclose(x2, x2_ref, atol=2e-4, rtol=2e-4), "step-1 x mismatch"
    assert jnp.allclose(model.hx, hx2_ref, atol=2e-4, rtol=2e-4), "step-1 hx mismatch"

    # ---- sequence path (bf16 batched matmuls, time-blocked recurrence) ----
    model.init_hid(batch_size=batch)
    # Force a small time block so the demo exercises the hidden-state carry
    # across more than one grid iteration.
    t_blk = 8
    x_seq, new_hx = pallas_gru_sequence(
        t_seq, model.hx, model.w3t_bf, model.w_iht_bf, model.w_hh_t,
        model.w4t_bf, t_blk=t_blk)
    x_seq = jax.block_until_ready(x_seq)
    hx_seq = jax.block_until_ready(new_hx)
    model.hx = new_hx

    h = jnp.zeros((batch, hid_dim), jnp.float32)
    for s in range(seq_len):
        xs_ref, h = _ref_gru_step(t_seq[s], h,
                                  model.w3, model.w_ih, model.w_hh, model.w4)
        # bf16 MXU operands (f32 accumulation / f32 recurrence) vs. f32 ref.
        assert jnp.allclose(x_seq[s], xs_ref, atol=5e-2, rtol=5e-2), \
            f"seq step {s} x mismatch"
    assert jnp.allclose(hx_seq, h, atol=5e-2, rtol=5e-2), "sequence final hx mismatch"

    print("KERNEL_OK")
</pallas_src>

<mosaic_0001>
module attributes {stable_mosaic.version = 11 : i64} {
  func.func @_dual_linear_kernel(%arg0: memref<8x128xf32, #tpu.memory_space<vmem>>, %arg1: memref<8x128xf32, #tpu.memory_space<vmem>>, %arg2: memref<128x128xbf16, #tpu.memory_space<vmem>>, %arg3: memref<128x128xbf16, #tpu.memory_space<vmem>>, %arg4: memref<8x128xf32, #tpu.memory_space<vmem>>, %arg5: memref<8x128xf32, #tpu.memory_space<vmem>>) attributes {dimension_semantics = [], scalar_prefetch = 0 : i64, scratch_operands = 0 : i64, tpu.core_type = #tpu.core_type<tc>} {
    %c0 = arith.constant 0 : index
    %c0_0 = arith.constant 0 : index
    %0 = vector.load %arg0[%c0, %c0_0] : memref<8x128xf32, #tpu.memory_space<vmem>>, vector<8x128xf32>
    %1 = arith.truncf %0 : vector<8x128xf32> to vector<8x128xbf16>
    %c0_1 = arith.constant 0 : index
    %c0_2 = arith.constant 0 : index
    %2 = vector.load %arg2[%c0_1, %c0_2] : memref<128x128xbf16, #tpu.memory_space<vmem>>, vector<128x128xbf16>
    %cst = arith.constant dense<0.000000e+00> : vector<8x128xf32>
    %3 = tpu.matmul %1, %2, %cst {dimension_numbers = #tpu.dot_dimension_numbers<[1], [0], [0], [1], [0, 0, 1, 1], [], []>} : vector<8x128xbf16>, vector<128x128xbf16>, vector<8x128xf32> -> vector<8x128xf32>
    %c0_3 = arith.constant 0 : index
    %c0_4 = arith.constant 0 : index
    %4 = vector.load %arg4[%c0_3, %c0_4] : memref<8x128xf32, #tpu.memory_space<vmem>>, vector<8x128xf32>
    tpu.vector_store %arg4[%c0_3, %c0_4], %3 {strides = array<i32>} : memref<8x128xf32, #tpu.memory_space<vmem>>, vector<8x128xf32>,
    %c0_5 = arith.constant 0 : index
    %c0_6 = arith.constant 0 : index
    %5 = vector.load %arg1[%c0_5, %c0_6] : memref<8x128xf32, #tpu.memory_space<vmem>>, vector<8x128xf32>
    %6 = arith.truncf %5 : vector<8x128xf32> to vector<8x128xbf16>
    %c0_7 = arith.constant 0 : index
    %c0_8 = arith.constant 0 : index
    %7 = vector.load %arg3[%c0_7, %c0_8] : memref<128x128xbf16, #tpu.memory_space<vmem>>, vector<128x128xbf16>
    %cst_9 = arith.constant dense<0.000000e+00> : vector<8x128xf32>
    %8 = tpu.matmul %6, %7, %cst_9 {dimension_numbers = #tpu.dot_dimension_numbers<[1], [0], [0], [1], [0, 0, 1, 1], [], []>} : vector<8x128xbf16>, vector<128x128xbf16>, vector<8x128xf32> -> vector<8x128xf32>
    %c0_10 = arith.constant 0 : index
    %c0_11 = arith.constant 0 : index
    %9 = vector.load %arg5[%c0_10, %c0_11] : memref<8x128xf32, #tpu.memory_space<vmem>>, vector<8x128xf32>
    tpu.vector_store %arg5[%c0_10, %c0_11], %8 {strides = array<i32>} : memref<8x128xf32, #tpu.memory_space<vmem>>, vector<8x128xf32>,
    return
  }
}

</mosaic_0001>

<llo_original>
// kernel: pallas_forward.1
$region0: #{pallas_forward.1}
  #allocation0 [shape = 'u32[]', space=smem, size = 0x4, offset = 0x4, fixed_abs, tag = 'smem constant byte address 0x4 - core index']
  #allocation1 [shape = 'u32[144,128]{1,0:T(1,128)}', space=vmem, size = 0x12000, scoped, tag = 'internal scratch']
  %s0 = inlined_call_operand.hbm [shape: f32[8,128], index: 0, kind: input, shape index: {}]
  %s1 = inlined_call_operand.hbm [shape: f32[8,128], index: 1, kind: input, shape index: {}]
  %s2 = inlined_call_operand.hbm [shape: bf16[128,128], index: 2, kind: input, shape index: {}]
  %s3 = inlined_call_operand.hbm [shape: bf16[128,128], index: 3, kind: input, shape index: {}]
  %s4 = inlined_call_operand.hbm [shape: f32[8,128], index: 4, kind: output, shape index: {0}]
  %s5 = inlined_call_operand.hbm [shape: f32[8,128], index: 5, kind: output, shape index: {1}]
  %6 = xla_tuple %s4, %s5
  %s7 = sld [smem:[#allocation0]]
  $region50: #{pallas_forward.1} parent=0
    _
  %s9 = ssub.s32 1, %s7
  %s10 = scalar_select 0, %s9, %s7
  $region1: #{pallas_forward.1} parent=0
    #allocation2 [shape = 'u8[4096]{0}', space=vmem, size = 0x1000, scoped, tag = 'input window, operand 0, single buffered']
    #allocation3 [shape = 's32[1]{0}', space=sflag, size = 0x4, scoped, tag = 'scoped memory for pallas_forward.1']
    #allocation4 [shape = 's32[1]{0}', space=sflag, size = 0x4, scoped, tag = 'scoped memory for pallas_forward.1']
    #allocation5 [shape = 'u8[4096]{0}', space=vmem, size = 0x1000, scoped, tag = 'input window, operand 1, single buffered']
    #allocation6 [shape = 's32[1]{0}', space=sflag, size = 0x4, scoped, tag = 'scoped memory for pallas_forward.1']
    #allocation7 [shape = 'u8[32768]{0}', space=vmem, size = 0x8000, scoped, tag = 'input window, operand 2, single buffered']
    #allocation8 [shape = 'u8[32768]{0}', space=vmem, size = 0x8000, scoped, tag = 'input window, operand 3, single buffered']
    #allocation9 [shape = 's32[1]{0}', space=sflag, size = 0x4, scoped, tag = 'scoped memory for pallas_forward.1']
    #allocation10 [shape = 'u8[4096]{0}', space=vmem, size = 0x1000, scoped, tag = 'output window, operand 0, single buffered']
    #allocation11 [shape = 'u8[4096]{0}', space=vmem, size = 0x1000, scoped, tag = 'output window, operand 1, single buffered']
    #allocation12 [shape = 's32[1]{0}', space=sflag, size = 0x4, scoped, tag = 'scoped memory for pallas_forward.1']
    %11 = vsyncpa [#allocation3], 0
    %12 = vsyncpa [#allocation6], 0
    %13 = vsyncpa [#allocation9], 0
    %14 = vsyncpa [#allocation4], 0
    %15 = vsyncpa [#allocation12], 0
    // Predicated region
    $region2: #{pallas_forward.1} parent=1 // pred_check
      _
    $region3: #{pallas_forward.1} parent=1 // pred_check_branch
      %17 = sbr.rel (0) target = $region5
    $region4: #{pallas_forward.1} parent=1 // pred_region
      %s19 = ssub.s32 128, 128
      %20 = vsyncadd [#allocation3], %s19
      %s22 = sshll.u32 [#allocation2], 4
      %s23 = int_to_ptr.vmem [resolvable:$true] %s22
      %25 = dma.hbm_to_vmem [thread:$0]  %s0, 128, %s23, [#allocation3]
    $region5: #{pallas_forward.1} parent=1 // pred_fallthru
      _
    // Predicated region
    $region6: #{pallas_forward.1} parent=1 // pred_check
      _
    $region7: #{pallas_forward.1} parent=1 // pred_check_branch
      %27 = sbr.rel (0) target = $region9
    $region8: #{pallas_forward.1} parent=1 // pred_region
      %s29 = ssub.s32 128, 128
      %30 = vsyncadd [#allocation6], %s29
      %s32 = sshll.u32 [#allocation5], 4
      %s33 = int_to_ptr.vmem [resolvable:$true] %s32
      %35 = dma.hbm_to_vmem [thread:$0]  %s1, 128, %s33, [#allocation6]
    $region9: #{pallas_forward.1} parent=1 // pred_fallthru
      _
    // Predicated region
    $region10: #{pallas_forward.1} parent=1 // pred_check
      _
    $region11: #{pallas_forward.1} parent=1 // pred_check_branch
      %37 = sbr.rel (0) target = $region13
    $region12: #{pallas_forward.1} parent=1 // pred_region
      %s39 = ssub.s32 1024, 1024
      %40 = vsyncadd [#allocation6], %s39
      %s41 = sshll.u32 [#allocation7], 4
      %s42 = int_to_ptr.vmem [resolvable:$true] %s41
      %47 = dma.hbm_to_vmem [thread:$0]  %s2, 1024, %s42, [#allocation6], 64, 64, 4
    $region13: #{pallas_forward.1} parent=1 // pred_fallthru
      _
    // Predicated region
    $region14: #{pallas_forward.1} parent=1 // pred_check
      _
    $region15: #{pallas_forward.1} parent=1 // pred_check_branch
      %49 = sbr.rel (0) target = $region17
    $region16: #{pallas_forward.1} parent=1 // pred_region
      %s51 = ssub.s32 1024, 1024
      %52 = vsyncadd [#allocation9], %s51
      %s53 = sshll.u32 [#allocation8], 4
      %s54 = int_to_ptr.vmem [resolvable:$true] %s53
      %59 = dma.hbm_to_vmem [thread:$0]  %s3, 1024, %s54, [#allocation9], 64, 64, 4
    $region17: #{pallas_forward.1} parent=1 // pred_fallthru
      _
    // Predicated region
    $region18: #{pallas_forward.1} parent=1 // pred_check
      _
    $region19: #{pallas_forward.1} parent=1 // pred_check_branch
      %61 = sbr.rel (0) target = $region21
    $region20: #{pallas_forward.1} parent=1 // pred_region
      %62 = dma.done [#allocation3], 128
    $region21: #{pallas_forward.1} parent=1 // pred_fallthru
      _
    // Predicated region
    $region22: #{pallas_forward.1} parent=1 // pred_check
      _
    $region23: #{pallas_forward.1} parent=1 // pred_check_branch
      %64 = sbr.rel (0) target = $region25
    $region24: #{pallas_forward.1} parent=1 // pred_region
      %65 = dma.done [#allocation6], 128
    $region25: #{pallas_forward.1} parent=1 // pred_fallthru
      _
    // Predicated region
    $region26: #{pallas_forward.1} parent=1 // pred_check
      _
    $region27: #{pallas_forward.1} parent=1 // pred_check_branch
      %67 = sbr.rel (0) target = $region29
    $region28: #{pallas_forward.1} parent=1 // pred_region
      %68 = dma.done [#allocation6], 1024
    $region29: #{pallas_forward.1} parent=1 // pred_fallthru
      _
    // Predicated region
    $region30: #{pallas_forward.1} parent=1 // pred_check
      _
    $region31: #{pallas_forward.1} parent=1 // pred_check_branch
      %70 = sbr.rel (0) target = $region33
    $region32: #{pallas_forward.1} parent=1 // pred_region
      %71 = dma.done [#allocation9], 1024
    $region33: #{pallas_forward.1} parent=1 // pred_fallthru
      _
    %v73 = vld [vmem:[#allocation2] sm:$0xff]
    %v74 = vpack.c.bf16 %v73, %v73
    %v75 = vld [vmem:[#allocation7] sm:$0xf]
    %v76 = vld [vmem:[#allocation7 + $0x4] sm:$0xf]
    %v77 = vld [vmem:[#allocation7 + $0x8] sm:$0xf]
    %v78 = vld [vmem:[#allocation7 + $0xc] sm:$0xf]
    %v79 = vld [vmem:[#allocation7 + $0x10] sm:$0xf]
    %v80 = vld [vmem:[#allocation7 + $0x14] sm:$0xf]
    %v81 = vld [vmem:[#allocation7 + $0x18] sm:$0xf]
    %v82 = vld [vmem:[#allocation7 + $0x1c] sm:$0xf]
    %v83 = vld [vmem:[#allocation7 + $0x20] sm:$0xf]
    %v84 = vld [vmem:[#allocation7 + $0x24] sm:$0xf]
    %v85 = vld [vmem:[#allocation7 + $0x28] sm:$0xf]
    %v86 = vld [vmem:[#allocation7 + $0x2c] sm:$0xf]
    %v87 = vld [vmem:[#allocation7 + $0x30] sm:$0xf]
    %v88 = vld [vmem:[#allocation7 + $0x34] sm:$0xf]
    %v89 = vld [vmem:[#allocation7 + $0x38] sm:$0xf]
    %v90 = vld [vmem:[#allocation7 + $0x3c] sm:$0xf]
    %v107 = vunpack.c.l.b16 %v75
    %v108 = vunpack.c.l.b16 %v76
    %v109 = vunpack.c.l.b16 %v77
    %v110 = vunpack.c.l.b16 %v78
    %v111 = vunpack.c.l.b16 %v79
    %v112 = vunpack.c.l.b16 %v80
    %v113 = vunpack.c.l.b16 %v81
    %v114 = vunpack.c.l.b16 %v82
    %v115 = vunpack.c.l.b16 %v83
    %v116 = vunpack.c.l.b16 %v84
    %v117 = vunpack.c.l.b16 %v85
    %v118 = vunpack.c.l.b16 %v86
    %v119 = vunpack.c.l.b16 %v87
    %v120 = vunpack.c.l.b16 %v88
    %v121 = vunpack.c.l.b16 %v89
    %v122 = vunpack.c.l.b16 %v90
    %v123 = vpack.c.b16 %v108, %v107
    %v124 = vpack.c.b16 %v110, %v109
    %v125 = vpack.c.b16 %v112, %v111
    %v126 = vpack.c.b16 %v114, %v113
    %v127 = vpack.c.b16 %v116, %v115
    %v128 = vpack.c.b16 %v118, %v117
    %v129 = vpack.c.b16 %v120, %v119
    %v130 = vpack.c.b16 %v122, %v121
    %139 = vmatprep.subr.bf16.mxu0 0
    %140 = vmatpush1.bf16.msra.mxu0 %v123
    %141 = vmatprep.subr.bf16.mxu0 0
    %142 = vmatpush1.bf16.msra.mxu0 %v124
    %143 = vmatprep.subr.bf16.mxu0 0
    %144 = vmatpush1.bf16.msra.mxu0 %v125
    %145 = vmatprep.subr.bf16.mxu0 0
    %146 = vmatpush1.bf16.msra.mxu0 %v126
    %147 = vmatprep.subr.bf16.mxu0 0
    %148 = vmatpush1.bf16.msra.mxu0 %v127
    %149 = vmatprep.subr.bf16.mxu0 0
    %150 = vmatpush1.bf16.msra.mxu0 %v128
    %151 = vmatprep.subr.bf16.mxu0 0
    %152 = vmatpush1.bf16.msra.mxu0 %v129
    %153 = vmatprep.subr.bf16.mxu0 0
    %154 = vmatpush1.bf16.msra.mxu0 %v130
    %155 = vmatprep.subr.bf16.mxu0 0
    %156 = vmatpush1.bf16.msra.mxu0 0
    %157 = vmatprep.subr.bf16.mxu0 0
    %158 = vmatpush1.bf16.msra.mxu0 0
    %159 = vmatprep.subr.bf16.mxu0 0
    %160 = vmatpush1.bf16.msra.mxu0 0
    %161 = vmatprep.subr.bf16.mxu0 0
    %162 = vmatpush1.bf16.msra.mxu0 0
    %163 = vmatprep.subr.bf16.mxu0 0
    %164 = vmatpush1.bf16.msra.mxu0 0
    %165 = vmatprep.subr.bf16.mxu0 0
    %166 = vmatpush1.bf16.msra.mxu0 0
    %167 = vmatprep.subr.bf16.mxu0 0
    %168 = vmatpush1.bf16.msra.mxu0 0
    %169 = vmatprep.subr.bf16.mxu0 0
    %170 = vmatpush1.bf16.msra.mxu0 0
    %171 = vmatprep.mubr.bf16.mxu0 0
    %172 = vmatmul.mubr.bf16.gmra.mrb[0].mxu0 %v74
    %v173 = vpop.f32.mrb[0].mxu0
    %v174 = vadd.f32 0.0, %v173
    %v175 = vpop.f32.mrb[0].mxu0
    %v176 = vpop.f32.mrb[0].mxu0
    %v177 = vpop.f32.mrb[0].mxu0
    %178 = vdwg.mxu0
    %179 = vst [vmem:[#allocation10] sm:$0xff] %v174
    %v180 = vld [vmem:[#allocation5] sm:$0xff]
    %v181 = vpack.c.bf16 %v180, %v180
    %v182 = vld [vmem:[#allocation8] sm:$0xf]
    %v183 = vld [vmem:[#allocation8 + $0x4] sm:$0xf]
    %v184 = vld [vmem:[#allocation8 + $0x8] sm:$0xf]
    %v185 = vld [vmem:[#allocation8 + $0xc] sm:$0xf]
    %v186 = vld [vmem:[#allocation8 + $0x10] sm:$0xf]
    %v187 = vld [vmem:[#allocation8 + $0x14] sm:$0xf]
    %v188 = vld [vmem:[#allocation8 + $0x18] sm:$0xf]
    %v189 = vld [vmem:[#allocation8 + $0x1c] sm:$0xf]
    %v190 = vld [vmem:[#allocation8 + $0x20] sm:$0xf]
    %v191 = vld [vmem:[#allocation8 + $0x24] sm:$0xf]
    %v192 = vld [vmem:[#allocation8 + $0x28] sm:$0xf]
    %v193 = vld [vmem:[#allocation8 + $0x2c] sm:$0xf]
    %v194 = vld [vmem:[#allocation8 + $0x30] sm:$0xf]
    %v195 = vld [vmem:[#allocation8 + $0x34] sm:$0xf]
    %v196 = vld [vmem:[#allocation8 + $0x38] sm:$0xf]
    %v197 = vld [vmem:[#allocation8 + $0x3c] sm:$0xf]
    %v214 = vunpack.c.l.b16 %v182
    %v215 = vunpack.c.l.b16 %v183
    %v216 = vunpack.c.l.b16 %v184
    %v217 = vunpack.c.l.b16 %v185
    %v218 = vunpack.c.l.b16 %v186
    %v219 = vunpack.c.l.b16 %v187
    %v220 = vunpack.c.l.b16 %v188
    %v221 = vunpack.c.l.b16 %v189
    %v222 = vunpack.c.l.b16 %v190
    %v223 = vunpack.c.l.b16 %v191
    %v224 = vunpack.c.l.b16 %v192
    %v225 = vunpack.c.l.b16 %v193
    %v226 = vunpack.c.l.b16 %v194
    %v227 = vunpack.c.l.b16 %v195
    %v228 = vunpack.c.l.b16 %v196
    %v229 = vunpack.c.l.b16 %v197
    %v230 = vpack.c.b16 %v215, %v214
    %v231 = vpack.c.b16 %v217, %v216
    %v232 = vpack.c.b16 %v219, %v218
    %v233 = vpack.c.b16 %v221, %v220
    %v234 = vpack.c.b16 %v223, %v222
    %v235 = vpack.c.b16 %v225, %v224
    %v236 = vpack.c.b16 %v227, %v226
    %v237 = vpack.c.b16 %v229, %v228
    %246 = vmatprep.subr.bf16.mxu0 0
    %247 = vmatpush1.bf16.msra.mxu0 %v230
    %248 = vmatprep.subr.bf16.mxu0 0
    %249 = vmatpush1.bf16.msra.mxu0 %v231
    %250 = vmatprep.subr.bf16.mxu0 0
    %251 = vmatpush1.bf16.msra.mxu0 %v232
    %252 = vmatprep.subr.bf16.mxu0 0
    %253 = vmatpush1.bf16.msra.mxu0 %v233
    %254 = vmatprep.subr.bf16.mxu0 0
    %255 = vmatpush1.bf16.msra.mxu0 %v234
    %256 = vmatprep.subr.bf16.mxu0 0
    %257 = vmatpush1.bf16.msra.mxu0 %v235
    %258 = vmatprep.subr.bf16.mxu0 0
    %259 = vmatpush1.bf16.msra.mxu0 %v236
    %260 = vmatprep.subr.bf16.mxu0 0
    %261 = vmatpush1.bf16.msra.mxu0 %v237
    %262 = vmatprep.subr.bf16.mxu0 0
    %263 = vmatpush1.bf16.msra.mxu0 0
    %264 = vmatprep.subr.bf16.mxu0 0
    %265 = vmatpush1.bf16.msra.mxu0 0
    %266 = vmatprep.subr.bf16.mxu0 0
    %267 = vmatpush1.bf16.msra.mxu0 0
    %268 = vmatprep.subr.bf16.mxu0 0
    %269 = vmatpush1.bf16.msra.mxu0 0
    %270 = vmatprep.subr.bf16.mxu0 0
    %271 = vmatpush1.bf16.msra.mxu0 0
    %272 = vmatprep.subr.bf16.mxu0 0
    %273 = vmatpush1.bf16.msra.mxu0 0
    %274 = vmatprep.subr.bf16.mxu0 0
    %275 = vmatpush1.bf16.msra.mxu0 0
    %276 = vmatprep.subr.bf16.mxu0 0
    %277 = vmatpush1.bf16.msra.mxu0 0
    %278 = vmatprep.mubr.bf16.mxu0 0
    %279 = vmatmul.mubr.bf16.gmra.mrb[0].mxu0 %v181
    %v280 = vpop.f32.mrb[0].mxu0
    %v281 = vadd.f32 0.0, %v280
    %v282 = vpop.f32.mrb[0].mxu0
    %v283 = vpop.f32.mrb[0].mxu0
    %v284 = vpop.f32.mrb[0].mxu0
    %285 = vdwg.mxu0
    %286 = vst [vmem:[#allocation11] sm:$0xff] %v281
    // Predicated region
    $region34: #{pallas_forward.1} parent=1 // pred_check
      _
    $region35: #{pallas_forward.1} parent=1 // pred_check_branch
      %288 = sbr.rel (0) target = $region37
    $region36: #{pallas_forward.1} parent=1 // pred_region
      %s290 = ssub.s32 128, 128
      %291 = vsyncadd [#allocation4], %s290
      %s293 = sshll.u32 [#allocation10], 4
      %s294 = int_to_ptr.vmem [resolvable:$true] %s293
      %296 = dma.vmem_to_hbm [thread:$0]  %s294, 128, %s4, [#allocation4]
    $region37: #{pallas_forward.1} parent=1 // pred_fallthru
      _
    // Predicated region
    $region38: #{pallas_forward.1} parent=1 // pred_check
      _
    $region39: #{pallas_forward.1} parent=1 // pred_check_branch
      %298 = sbr.rel (0) target = $region41
    $region40: #{pallas_forward.1} parent=1 // pred_region
      %s300 = ssub.s32 128, 128
      %301 = vsyncadd [#allocation12], %s300
      %s303 = sshll.u32 [#allocation11], 4
      %s304 = int_to_ptr.vmem [resolvable:$true] %s303
      %306 = dma.vmem_to_hbm [thread:$0]  %s304, 128, %s5, [#allocation12]
    $region41: #{pallas_forward.1} parent=1 // pred_fallthru
      _
    // Predicated region
    $region42: #{pallas_forward.1} parent=1 // pred_check
      _
    $region43: #{pallas_forward.1} parent=1 // pred_check_branch
      %308 = sbr.rel (0) target = $region45
    $region44: #{pallas_forward.1} parent=1 // pred_region
      %309 = dma.done [#allocation4], 128
    $region45: #{pallas_forward.1} parent=1 // pred_fallthru
      _
    // Predicated region
    $region46: #{pallas_forward.1} parent=1 // pred_check
      _
    $region47: #{pallas_forward.1} parent=1 // pred_check_branch
      %311 = sbr.rel (0) target = $region49
    $region48: #{pallas_forward.1} parent=1 // pred_region
      %312 = dma.done [#allocation12], 128
    $region49: #{pallas_forward.1} parent=1 // pred_fallthru
      _
    %313 = vsyncpa [#allocation3], 1
    %314 = vsyncpa [#allocation6], 1
    %315 = vsyncpa [#allocation9], 1
    %316 = vsyncpa [#allocation4], 1
    %317 = vsyncpa [#allocation12], 1

</llo_original>
